<compile_context>
chip_gen: v7x
topology: tpu7x:2x2x1
jax: 0.10.0
libtpu: 0.0.40
codegen_flags: <defaults>
</compile_context>

<pallas_src>
import functools

import jax
import jax.numpy as jnp
from jax import lax
from jax.experimental import pallas as pl
from jax.experimental.pallas import tpu as pltpu

IGNORE_INDEX = -100
_NEG_BIG = -1e30

_MAX_VOCAB_TILE = 8192        # lanes per vocab block (multiple of 128)
_MAX_ROW_TILE = 1024


# --------------------------------------------------------------------------- #
# Hardware-aware tile sizing
# --------------------------------------------------------------------------- #
@functools.lru_cache(maxsize=None)
def _vmem_capacity_bytes():
    try:
        cap = int(pltpu.get_tpu_info().vmem_capacity_bytes)
        if cap > 0:
            return cap
    except Exception:
        pass
    return 64 * 1024 * 1024   # conservative fallback (v7x per-TC VMEM)


def _vmem_limit_bytes():
    # leave ~25% headroom below physical VMEM
    return int(_vmem_capacity_bytes() * 3 // 4)


def _target_block_bytes(itemsize, with_argmax):
    """Native-dtype bytes for one logits block, budgeted against this chip's VMEM.

    Peak VMEM ~ 2 double-buffered native input blocks + k block-sized f32/i32 temps
    (upcast, iota, selects, exp).  128 MiB chips (v5e/v6e) -> ~8 MiB bf16 blocks,
    64 MiB/TC (v7x) -> ~4 MiB.
    """
    usable = _vmem_limit_bytes()
    k = 5 if with_argmax else 4
    f32_per_native = max(1, 4 // itemsize)      # f32 temp cost in native-block units
    denom = 2 + k * f32_per_native
    return max(1 << 20, usable // denom)


def _pick_tv(vocab, cap=_MAX_VOCAB_TILE):
    """Prefer a vocab tile that divides V (no lane masking anywhere)."""
    if vocab <= cap:
        return vocab
    best = (cap // 128) * 128
    floor = max(128, best // 2)
    t = best
    while t >= floor:
        if vocab % t == 0:
            return t
        t -= 128
    return best                                  # ragged fallback: mask last tile only


def _auto_tiles(num_rows, vocab, itemsize, with_argmax, row_tile=None, vocab_tile=None):
    """Pick legal (tn, tv): tn multiple of 8 (or == num_rows), tv multiple of 128 (or == V)."""
    if vocab_tile is not None:
        tv = min(int(vocab_tile), vocab)
        if tv < vocab:
            tv = max(128, (tv // 128) * 128)
            if tv >= vocab:
                tv = vocab
    else:
        tv = _pick_tv(vocab)

    block_bytes = _target_block_bytes(itemsize, with_argmax)
    if row_tile is None:
        tn = (block_bytes // max(1, tv * itemsize)) // 8 * 8
        tn = max(8, min(_MAX_ROW_TILE, tn))
        # Keep the "parallel" row axis wide enough to shard across TensorCores (v7x
        # megacore): aim for >= ~4 row tiles when there are enough rows.
        if num_rows >= 64:
            tn = min(tn, max(8, (num_rows // 4) // 8 * 8))
    else:
        tn = max(8, (int(row_tile) // 8) * 8)

    if num_rows <= tn:
        tn = num_rows            # full-dim block is always legal, no OOB rows
    return int(tn), int(tv)


# --------------------------------------------------------------------------- #
# Kernel
# --------------------------------------------------------------------------- #
def _ce_kernel(labels_ref, logits_ref, *refs, tv, rem, with_argmax):
    """Online (vocab-tiled) cross entropy (+ optional argmax) for a (tn, tv) block.

    labels_ref : (tn, 1) int32   shifted labels (IGNORE_INDEX for ignored/padded rows)
    logits_ref : (tn, tv) native dtype (bf16/f32); cast to f32 in-register
    outputs    : loss (tn,1) f32 [, argmax (tn,1) i32]
    scratch    : running max (m), running exp-sum (l), picked-label logit (p)
                 [, running argmax index (idx)]
    rem        : V % tv (static) -- 0 means no lane masking is needed at all.
    """
    if with_argmax:
        loss_ref, amax_ref, m_ref, l_ref, p_ref, idx_ref = refs
    else:
        loss_ref, m_ref, l_ref, p_ref = refs
        amax_ref = idx_ref = None

    k = pl.program_id(1)
    nk = pl.num_programs(1)

    @pl.when(k == 0)
    def _init():
        m_ref[...] = jnp.full_like(m_ref, _NEG_BIG)
        l_ref[...] = jnp.zeros_like(l_ref)
        p_ref[...] = jnp.full_like(p_ref, _NEG_BIG)
        if with_argmax:
            idx_ref[...] = jnp.zeros_like(idx_ref)

    labels = labels_ref[...]                                  # (tn, 1)
    x_raw = logits_ref[...].astype(jnp.float32)               # (tn, tv), f32 in-register
    # Grid-invariant local column index; shift the label into the tile's local frame
    # instead of building a global O(tn*tv) column index each step.
    local_col = lax.broadcasted_iota(jnp.int32, x_raw.shape, 1)
    local_label = labels - k * tv                              # (tn, 1)

    def update(x):
        tile_max = jnp.max(x, axis=-1, keepdims=True)          # (tn, 1)
        picked = jnp.max(jnp.where(local_col == local_label, x, _NEG_BIG),
                         axis=-1, keepdims=True)               # (tn, 1)
        m_old = m_ref[...]
        m_new = jnp.maximum(m_old, tile_max)
        alpha = jnp.exp(m_old - m_new)                          # 0.0 on first tile
        l_ref[...] = l_ref[...] * alpha + jnp.sum(jnp.exp(x - m_new),
                                                  axis=-1, keepdims=True)
        p_ref[...] = jnp.maximum(p_ref[...], picked)
        if with_argmax:
            local_idx = jnp.min(jnp.where(x == tile_max, local_col, tv),
                                axis=-1, keepdims=True)         # (tn, 1)
            tile_idx = local_idx + k * tv
            # Earlier tiles win ties (first-index-of-max, like torch.argmax).
            idx_ref[...] = jnp.where(tile_max > m_old, tile_idx,
                                     idx_ref[...]).astype(jnp.int32)
        m_ref[...] = m_new

    if rem == 0:
        update(x_raw)                                          # no masking anywhere
    else:
        @pl.when(k < nk - 1)
        def _interior():                                       # unmasked fast path
            update(x_raw)

        @pl.when(k == nk - 1)
        def _ragged_last():                                    # mask only the last tile
            update(jnp.where(local_col < rem, x_raw, _NEG_BIG))

    @pl.when(k == nk - 1)
    def _finalize():
        lse = m_ref[...] + jnp.log(l_ref[...])
        valid = labels != IGNORE_INDEX
        loss_ref[...] = jnp.where(valid, lse - p_ref[...], 0.0)
        if with_argmax:
            amax_ref[...] = idx_ref[...]


# --------------------------------------------------------------------------- #
# pallas_call wrapper
# --------------------------------------------------------------------------- #
def _ce_pallas(logits2d, shift_labels, tn, tv, with_argmax):
    """Runs the kernel over the (R, V) flattened logits (no copy of logits is made).

    Returns (loss (R_pad, 1) f32, argmax (R_pad, 1) i32 or None); padded rows have
    loss exactly 0 (their labels are IGNORE_INDEX).
    """
    R, V = logits2d.shape
    grid_r = pl.cdiv(R, tn)
    grid_k = pl.cdiv(V, tv)
    R_pad = grid_r * tn
    rem = V % tv

    labels_col = jnp.full((R_pad, 1), IGNORE_INDEX, jnp.int32)
    labels_col = labels_col.at[:R, 0].set(shift_labels.astype(jnp.int32))

    kernel = functools.partial(_ce_kernel, tv=tv, rem=rem, with_argmax=with_argmax)

    if with_argmax:
        out_shape = (jax.ShapeDtypeStruct((R_pad, 1), jnp.float32),
                     jax.ShapeDtypeStruct((R_pad, 1), jnp.int32))
        out_specs = (pl.BlockSpec((tn, 1), lambda i, k: (i, 0)),
                     pl.BlockSpec((tn, 1), lambda i, k: (i, 0)))
        scratch = [pltpu.VMEM((tn, 1), jnp.float32),   # running max
                   pltpu.VMEM((tn, 1), jnp.float32),   # running exp-sum
                   pltpu.VMEM((tn, 1), jnp.float32),   # picked-label logit
                   pltpu.VMEM((tn, 1), jnp.int32)]     # running argmax
    else:
        out_shape = jax.ShapeDtypeStruct((R_pad, 1), jnp.float32)
        out_specs = pl.BlockSpec((tn, 1), lambda i, k: (i, 0))
        scratch = [pltpu.VMEM((tn, 1), jnp.float32),
                   pltpu.VMEM((tn, 1), jnp.float32),
                   pltpu.VMEM((tn, 1), jnp.float32)]

    result = pl.pallas_call(
        kernel,
        out_shape=out_shape,
        grid_spec=pltpu.PrefetchScalarGridSpec(
            num_scalar_prefetch=0,
            grid=(grid_r, grid_k),
            in_specs=[
                pl.BlockSpec((tn, 1), lambda i, k: (i, 0)),
                pl.BlockSpec((tn, tv), lambda i, k: (i, k)),
            ],
            out_specs=out_specs,
            scratch_shapes=scratch,
        ),
        compiler_params=pltpu.CompilerParams(
            dimension_semantics=("parallel", "arbitrary"),
            vmem_limit_bytes=_vmem_limit_bytes(),
        ),
    )(labels_col, logits2d)

    if with_argmax:
        loss, amax = result
        return loss, amax
    return result, None


@functools.partial(jax.jit, static_argnames=("penalty_weight", "tn", "tv"))
def _forward(logits, labels, input_ids, penalty_weight, tn, tv):
    S, V = logits.shape[-2], logits.shape[-1]
    logits2d = logits.reshape(-1, V)                     # no HBM copy
    labels2 = labels.reshape(-1, S).astype(jnp.int32)
    B = labels2.shape[0]
    N = B * (S - 1)                                      # torch .mean() denominator
    R = B * S

    # Shift handled via labels only: row b*S+s predicts labels[b, s+1];
    # the last seq position of each batch is ignored (loss contributes 0).
    shift_labels = jnp.concatenate(
        [labels2[:, 1:], jnp.full((B, 1), IGNORE_INDEX, jnp.int32)], axis=1
    ).reshape(-1)                                        # (R,)

    with_argmax = penalty_weight != 0
    loss_pad, amax_pad = _ce_pallas(logits2d, shift_labels, tn, tv, with_argmax)
    ce_sum = jnp.sum(loss_pad)                           # pad / ignored rows are exactly 0

    if not with_argmax:
        return ce_sum / N

    # O(V) membership test instead of the O(R^2) equality matrix.
    tok = jnp.clip(amax_pad[:R, 0], 0, V - 1)
    presence = jnp.zeros((V,), jnp.float32).at[input_ids.reshape(-1)].set(1.0, mode="drop")
    dup = presence[tok]                                  # (R,)
    extra = jnp.sum(loss_pad[:R, 0] * dup) * penalty_weight
    return (ce_sum + extra) / N


class CrossEntropyLoss:
    """JAX/Pallas port of the PyTorch CrossEntropyLoss module."""

    def __init__(self, penalty_weight=0):
        self.penalty_weight = penalty_weight

    def __call__(self, logits, labels, input_ids, *args,
                 row_tile=None, vocab_tile=None, **kwargs):
        V = logits.shape[-1]
        num_rows = 1
        for d in logits.shape[:-1]:
            num_rows *= int(d)
        with_argmax = float(self.penalty_weight) != 0.0
        tn, tv = _auto_tiles(num_rows, V, jnp.dtype(logits.dtype).itemsize,
                             with_argmax, row_tile, vocab_tile)
        return _forward(logits, labels, input_ids, float(self.penalty_weight), tn, tv)


# --------------------------------------------------------------------------- #
# Reference + self-test
# --------------------------------------------------------------------------- #
def _reference_loss(logits, labels, input_ids, penalty_weight):
    """Pure-JAX reference mirroring the PyTorch semantics."""
    V = logits.shape[-1]
    shift_logits = logits[..., :-1, :].reshape(-1, V).astype(jnp.float32)
    shift_labels = labels[..., 1:].reshape(-1)
    logp = jax.nn.log_softmax(shift_logits, axis=-1)
    valid = shift_labels != IGNORE_INDEX
    safe = jnp.clip(shift_labels, 0, V - 1)
    picked = jnp.take_along_axis(logp, safe[:, None], axis=-1)[:, 0]
    ce = jnp.where(valid, -picked, 0.0)
    if penalty_weight == 0:
        return jnp.mean(ce)
    tok = jnp.argmax(shift_logits, axis=-1)
    dup = jnp.any(tok[:, None] == input_ids.reshape(-1)[None, :], axis=-1).astype(jnp.float32)
    return jnp.mean(ce * (1.0 + dup * penalty_weight))


if __name__ == "__main__":
    # small, deterministic example: batch=2, seq=9, vocab=256
    B, S, V = 2, 9, 256
    key = jax.random.PRNGKey(0)
    k1, k2, k3 = jax.random.split(key, 3)
    logits = jax.random.normal(k1, (B, S, V), dtype=jnp.float32)
    labels = jax.random.randint(k2, (B, S), 0, V, dtype=jnp.int32)
    labels = labels.at[0, 3].set(IGNORE_INDEX).at[1, 7].set(IGNORE_INDEX)
    input_ids = jax.random.randint(k3, (B, S), 0, V, dtype=jnp.int32)

    for pw in (0, 0.5):
        ref = _reference_loss(logits, labels, input_ids, pw)

        # auto tiles (single vocab tile: V <= cap); pw==0 uses the no-argmax kernel
        out = jax.block_until_ready(CrossEntropyLoss(pw)(logits, labels, input_ids))
        assert abs(float(out) - float(ref)) < 1e-3, (pw, float(out), float(ref))

        # forced tiling: online LSE across 2 vocab tiles + partial row blocks (rem == 0)
        out_t = jax.block_until_ready(
            CrossEntropyLoss(pw)(logits, labels, input_ids, row_tile=8, vocab_tile=128))
        assert abs(float(out_t) - float(ref)) < 1e-3, (pw, float(out_t), float(ref))

    # Ragged vocab tiling (V % tv != 0): exercises the masked last-tile path.
    B2, S2, V2 = 2, 7, 320
    logits2 = jax.random.normal(jax.random.PRNGKey(1), (B2, S2, V2), dtype=jnp.float32)
    labels2 = jax.random.randint(jax.random.PRNGKey(2), (B2, S2), 0, V2, dtype=jnp.int32)
    input_ids2 = jax.random.randint(jax.random.PRNGKey(3), (B2, S2), 0, V2, dtype=jnp.int32)
    for pw in (0, 0.5):
        ref2 = _reference_loss(logits2, labels2, input_ids2, pw)
        out2 = jax.block_until_ready(
            CrossEntropyLoss(pw)(logits2, labels2, input_ids2, row_tile=8, vocab_tile=128))
        assert abs(float(out2) - float(ref2)) < 1e-3, (pw, float(out2), float(ref2))

    # bf16 path: logits stay bf16 in HBM, cast to f32 only inside the kernel
    logits_bf16 = logits.astype(jnp.bfloat16)
    ref_b = _reference_loss(logits_bf16, labels, input_ids, 0.5)
    out_b = jax.block_until_ready(CrossEntropyLoss(0.5)(logits_bf16, labels, input_ids))
    assert abs(float(out_b) - float(ref_b)) < 2e-3, (float(out_b), float(ref_b))

    print("KERNEL_OK")
</pallas_src>

<mosaic_0001>
module attributes {stable_mosaic.version = 11 : i64} {
  func.func @_ce_kernel(%arg0: i32, %arg1: i32, %arg2: memref<18x1xi32, #tpu.memory_space<vmem>>, %arg3: memref<18x256xf32, #tpu.memory_space<vmem>>, %arg4: memref<18x1xf32, #tpu.memory_space<vmem>>, %arg5: memref<18x1xf32, #tpu.memory_space<vmem>>, %arg6: memref<18x1xf32, #tpu.memory_space<vmem>>, %arg7: memref<18x1xf32, #tpu.memory_space<vmem>>) attributes {dimension_semantics = [#tpu.dimension_semantics<parallel>, #tpu.dimension_semantics<arbitrary>], iteration_bounds = array<i64: 1, 1>, scalar_prefetch = 0 : i64, scratch_operands = 3 : i64, tpu.core_type = #tpu.core_type<tc>, window_params = [{transform_indices = @transform_0, window_bounds = array<i64: 18, 1>}, {transform_indices = @transform_1, window_bounds = array<i64: 18, 256>}, {transform_indices = @transform_2, window_bounds = array<i64: 18, 1>}]} {
    %c0_i32 = arith.constant 0 : i32
    %0 = arith.cmpi eq, %arg1, %c0_i32 : i32
    %1 = arith.extui %0 : i1 to i32
    %c0_i32_0 = arith.constant 0 : i32
    %2 = arith.cmpi ne, %1, %c0_i32_0 : i32
    scf.if %2 {
      %cst_21 = arith.constant -1.000000e+30 : f32
      %37 = vector.broadcast %cst_21 : f32 to vector<18x1xf32>
      %c0_22 = arith.constant 0 : index
      %c0_23 = arith.constant 0 : index
      %38 = vector.load %arg5[%c0_22, %c0_23] : memref<18x1xf32, #tpu.memory_space<vmem>>, vector<18x1xf32>
      tpu.vector_store %arg5[%c0_22, %c0_23], %37 {strides = array<i32>} : memref<18x1xf32, #tpu.memory_space<vmem>>, vector<18x1xf32>,
      %cst_24 = arith.constant 0.000000e+00 : f32
      %39 = vector.broadcast %cst_24 : f32 to vector<18x1xf32>
      %c0_25 = arith.constant 0 : index
      %c0_26 = arith.constant 0 : index
      %40 = vector.load %arg6[%c0_25, %c0_26] : memref<18x1xf32, #tpu.memory_space<vmem>>, vector<18x1xf32>
      tpu.vector_store %arg6[%c0_25, %c0_26], %39 {strides = array<i32>} : memref<18x1xf32, #tpu.memory_space<vmem>>, vector<18x1xf32>,
      %cst_27 = arith.constant -1.000000e+30 : f32
      %41 = vector.broadcast %cst_27 : f32 to vector<18x1xf32>
      %c0_28 = arith.constant 0 : index
      %c0_29 = arith.constant 0 : index
      %42 = vector.load %arg7[%c0_28, %c0_29] : memref<18x1xf32, #tpu.memory_space<vmem>>, vector<18x1xf32>
      tpu.vector_store %arg7[%c0_28, %c0_29], %41 {strides = array<i32>} : memref<18x1xf32, #tpu.memory_space<vmem>>, vector<18x1xf32>,
    } else {
    }
    %c0 = arith.constant 0 : index
    %c0_1 = arith.constant 0 : index
    %3 = vector.load %arg2[%c0, %c0_1] : memref<18x1xi32, #tpu.memory_space<vmem>>, vector<18x1xi32>
    %c0_2 = arith.constant 0 : index
    %c0_3 = arith.constant 0 : index
    %4 = vector.load %arg3[%c0_2, %c0_3] : memref<18x256xf32, #tpu.memory_space<vmem>>, vector<18x256xf32>
    %5 = tpu.iota {dimensions = array<i32: 1>} : vector<18x256xi32>
    %c256_i32 = arith.constant 256 : i32
    %6 = arith.muli %arg1, %c256_i32 : i32
    %7 = vector.broadcast %6 : i32 to vector<18x1xi32>
    %8 = arith.subi %3, %7 : vector<18x1xi32>
    %cst = arith.constant dense<0xFF800000> : vector<18xf32>
    %9 = vector.multi_reduction <maximumf>, %4, %cst [1] : vector<18x256xf32> to vector<18xf32>
    %10 = vector.shape_cast %9 : vector<18xf32> to vector<18x1xf32>
    %11 = vector.broadcast %8 : vector<18x1xi32> to vector<18x256xi32>
    %12 = arith.cmpi eq, %5, %11 : vector<18x256xi32>
    %cst_4 = arith.constant -1.000000e+30 : f32
    %13 = vector.broadcast %cst_4 : f32 to vector<18x256xf32>
    %14 = arith.select %12, %4, %13 : vector<18x256xi1>, vector<18x256xf32>
    %cst_5 = arith.constant dense<0xFF800000> : vector<18xf32>
    %15 = vector.multi_reduction <maximumf>, %14, %cst_5 [1] : vector<18x256xf32> to vector<18xf32>
    %16 = vector.shape_cast %15 : vector<18xf32> to vector<18x1xf32>
    %c0_6 = arith.constant 0 : index
    %c0_7 = arith.constant 0 : index
    %17 = vector.load %arg5[%c0_6, %c0_7] : memref<18x1xf32, #tpu.memory_space<vmem>>, vector<18x1xf32>
    %18 = arith.maximumf %17, %10 : vector<18x1xf32>
    %19 = arith.subf %17, %18 : vector<18x1xf32>
    %20 = math.exp %19 : vector<18x1xf32>
    %c0_8 = arith.constant 0 : index
    %c0_9 = arith.constant 0 : index
    %21 = vector.load %arg6[%c0_8, %c0_9] : memref<18x1xf32, #tpu.memory_space<vmem>>, vector<18x1xf32>
    %22 = arith.mulf %21, %20 : vector<18x1xf32>
    %23 = vector.broadcast %18 : vector<18x1xf32> to vector<18x256xf32>
    %24 = arith.subf %4, %23 : vector<18x256xf32>
    %25 = math.exp %24 : vector<18x256xf32>
    %cst_10 = arith.constant dense<0.000000e+00> : vector<18xf32>
    %26 = vector.multi_reduction <add>, %25, %cst_10 [1] : vector<18x256xf32> to vector<18xf32>
    %27 = vector.shape_cast %26 : vector<18xf32> to vector<18x1xf32>
    %28 = arith.addf %22, %27 : vector<18x1xf32>
    %c0_11 = arith.constant 0 : index
    %c0_12 = arith.constant 0 : index
    %29 = vector.load %arg6[%c0_11, %c0_12] : memref<18x1xf32, #tpu.memory_space<vmem>>, vector<18x1xf32>
    tpu.vector_store %arg6[%c0_11, %c0_12], %28 {strides = array<i32>} : memref<18x1xf32, #tpu.memory_space<vmem>>, vector<18x1xf32>,
    %c0_13 = arith.constant 0 : index
    %c0_14 = arith.constant 0 : index
    %30 = vector.load %arg7[%c0_13, %c0_14] : memref<18x1xf32, #tpu.memory_space<vmem>>, vector<18x1xf32>
    %31 = arith.maximumf %30, %16 : vector<18x1xf32>
    %c0_15 = arith.constant 0 : index
    %c0_16 = arith.constant 0 : index
    %32 = vector.load %arg7[%c0_15, %c0_16] : memref<18x1xf32, #tpu.memory_space<vmem>>, vector<18x1xf32>
    tpu.vector_store %arg7[%c0_15, %c0_16], %31 {strides = array<i32>} : memref<18x1xf32, #tpu.memory_space<vmem>>, vector<18x1xf32>,
    %c0_17 = arith.constant 0 : index
    %c0_18 = arith.constant 0 : index
    %33 = vector.load %arg5[%c0_17, %c0_18] : memref<18x1xf32, #tpu.memory_space<vmem>>, vector<18x1xf32>
    tpu.vector_store %arg5[%c0_17, %c0_18], %18 {strides = array<i32>} : memref<18x1xf32, #tpu.memory_space<vmem>>, vector<18x1xf32>,
    %c0_i32_19 = arith.constant 0 : i32
    %34 = arith.cmpi eq, %arg1, %c0_i32_19 : i32
    %35 = arith.extui %34 : i1 to i32
    %c0_i32_20 = arith.constant 0 : i32
    %36 = arith.cmpi ne, %35, %c0_i32_20 : i32
    scf.if %36 {
      %c0_21 = arith.constant 0 : index
      %c0_22 = arith.constant 0 : index
      %37 = vector.load %arg5[%c0_21, %c0_22] : memref<18x1xf32, #tpu.memory_space<vmem>>, vector<18x1xf32>
      %c0_23 = arith.constant 0 : index
      %c0_24 = arith.constant 0 : index
      %38 = vector.load %arg6[%c0_23, %c0_24] : memref<18x1xf32, #tpu.memory_space<vmem>>, vector<18x1xf32>
      %39 = math.log %38 : vector<18x1xf32>
      %40 = arith.addf %37, %39 : vector<18x1xf32>
      %c-100_i32 = arith.constant -100 : i32
      %41 = vector.broadcast %c-100_i32 : i32 to vector<18x1xi32>
      %42 = arith.cmpi ne, %3, %41 : vector<18x1xi32>
      %c0_25 = arith.constant 0 : index
      %c0_26 = arith.constant 0 : index
      %43 = vector.load %arg7[%c0_25, %c0_26] : memref<18x1xf32, #tpu.memory_space<vmem>>, vector<18x1xf32>
      %44 = arith.subf %40, %43 : vector<18x1xf32>
      %cst_27 = arith.constant 0.000000e+00 : f32
      %45 = vector.broadcast %cst_27 : f32 to vector<18x1xf32>
      %46 = arith.select %42, %44, %45 : vector<18x1xi1>, vector<18x1xf32>
      %c0_28 = arith.constant 0 : index
      %c0_29 = arith.constant 0 : index
      %47 = vector.load %arg4[%c0_28, %c0_29] : memref<18x1xf32, #tpu.memory_space<vmem>>, vector<18x1xf32>
      tpu.vector_store %arg4[%c0_28, %c0_29], %46 {strides = array<i32>} : memref<18x1xf32, #tpu.memory_space<vmem>>, vector<18x1xf32>,
    } else {
    }
    return
  }
  func.func @transform_0(%arg0: i32, %arg1: i32) -> (i32, i32) {
    %c0_i32 = arith.constant 0 : i32
    %c0_i32_0 = arith.constant 0 : i32
    return %arg0, %c0_i32 : i32, i32
  }
  func.func @transform_1(%arg0: i32, %arg1: i32) -> (i32, i32) {
    %c0_i32 = arith.constant 0 : i32
    return %arg0, %arg1 : i32, i32
  }
  func.func @transform_2(%arg0: i32, %arg1: i32) -> (i32, i32) {
    %c0_i32 = arith.constant 0 : i32
    %c0_i32_0 = arith.constant 0 : i32
    return %arg0, %c0_i32 : i32, i32
  }
}

</mosaic_0001>

<llo_original>
// kernel: _forward.1
$region0: #{_forward.1}
  #allocation0 [shape = 'u32[]', space=smem, size = 0x4, offset = 0x4, fixed_abs, tag = 'smem constant byte address 0x4 - core index']
  #allocation1 [shape = 'u32[144,128]{1,0:T(1,128)}', space=vmem, size = 0x12000, scoped, tag = 'internal scratch']
  #allocation2 [shape = 'f32[18,1]{1,0:T(8,128)}', space=vmem, size = 0x3000, scoped, tag = 'scratch operand']
  #allocation3 [shape = 'f32[18,1]{1,0:T(8,128)}', space=vmem, size = 0x3000, scoped, tag = 'scratch operand']
  #allocation4 [shape = 'f32[18,1]{1,0:T(8,128)}', space=vmem, size = 0x3000, scoped, tag = 'scratch operand']
  %s0 = inlined_call_operand.vmem [shape: s32[18,1], index: 0, kind: input, shape index: {}]
  %s1 = inlined_call_operand.vmem [shape: f32[18,256], index: 1, kind: input, shape index: {}]
  %s2 = inlined_call_operand.vmem [shape: f32[18,1], index: 2, kind: output, shape index: {}]
  %s3 = sld [smem:[#allocation0]]
  $region26: #{_forward.1} parent=0
    _
  %s5 = ssub.s32 1, %s3
  %s6 = scalar_select 0, %s5, %s3
  // Predicated region
  $region2: #{_forward.1} parent=0 // pred_check
    _
  $region3: #{_forward.1} parent=0 // pred_check_branch
    %8 = sbr.rel (0) target = $region5
  $region4: #{_forward.1} parent=0 // pred_region
    _
  $region5: #{_forward.1} parent=0 // pred_fallthru
    _
  // Predicated region
  $region6: #{_forward.1} parent=0 // pred_check
    _
  $region7: #{_forward.1} parent=0 // pred_check_branch
    %10 = sbr.rel (0) target = $region9
  $region8: #{_forward.1} parent=0 // pred_region
    _
  $region9: #{_forward.1} parent=0 // pred_fallthru
    _
  %p11 = scmp.eq.s32.totalorder 0, 0
  // Predicated region
  $region10: #{_forward.1} parent=0 // pred_check
    %p12 = pneg %p11
  $region11: #{_forward.1} parent=0 // pred_check_branch
    %14 = sbr.rel (%p12) target = $region13
  $region12: #{_forward.1} parent=0 // pred_region
    %vm15 = vcmask 7168
    %16 = vst.msk [vmem:[#allocation2] sm:$0xff] %vm15, -1e+30
    %17 = vst.msk [vmem:[#allocation2 + $0x8] sm:$0xff] %vm15, -1e+30
    %vm18 = vcmask 1024
    %19 = vst.msk [vmem:[#allocation2 + $0x10] sm:$0x3] %vm18, -1e+30
    %20 = vst.msk [vmem:[#allocation3] sm:$0xff] %vm15, 0.0
    %21 = vst.msk [vmem:[#allocation3 + $0x8] sm:$0xff] %vm15, 0.0
    %22 = vst.msk [vmem:[#allocation3 + $0x10] sm:$0x3] %vm18, 0.0
    %23 = vst.msk [vmem:[#allocation4] sm:$0xff] %vm15, -1e+30
    %24 = vst.msk [vmem:[#allocation4 + $0x8] sm:$0xff] %vm15, -1e+30
    %25 = vst.msk [vmem:[#allocation4 + $0x10] sm:$0x3] %vm18, -1e+30
  $region13: #{_forward.1} parent=0 // pred_fallthru
    _
  %v26 = vld [vmem:[%s0] sm:$0xff]
  %v27 = vld [vmem:[%s0 + $0x8] sm:$0xff]
  %v28 = vld [vmem:[%s0 + $0x10] sm:$0x3]
  %v29 = vld [vmem:[%s1] sm:$0xff]
  %v30 = vld [vmem:[%s1 + $0x8] sm:$0xff]
  %v31 = vld [vmem:[%s1 + $0x10] sm:$0xff]
  %v32 = vld [vmem:[%s1 + $0x18] sm:$0xff]
  %v33 = vld [vmem:[%s1 + $0x20] sm:$0x3]
  %v34 = vld [vmem:[%s1 + $0x28] sm:$0x3]
  %v35 = vlaneseq
  %v36 = vand.u32 %v35, 127
  %v37 = vadd.s32 %v36, 128
  %s38 = smul.u32 0, 256
  %v39 = vstv %s38
  %v40 = vsub.s32 %v26, %v39
  %v41 = vsub.s32 %v27, %v39
  %v42 = vsub.s32 %v28, %v39
  %v43 = vmax.f32 %v29, %v30
  %44 = vmax.xlane.f32.xlu0 %v43
  %v45 = vpop.xlane.xlu0 %44
  %v46 = vmax.f32 %v31, %v32
  %47 = vmax.xlane.f32.xlu0 %v46
  %v48 = vpop.xlane.xlu0 %47
  %vm49 = vcmask 1041408
  %v50 = vsel %vm49, %v33, -inf
  %v51 = vsel %vm49, %v34, -inf
  %v52 = vmax.f32 %v50, %v51
  %53 = vmax.xlane.f32.xlu0 %v52
  %v54 = vpop.xlane.xlu0 %53
  %55 = vset.pattern.permute.xlu0 0
  %56 = vperm.xlu0 %55, %v40
  %v57 = vpop.permute.xlu0 %56
  %58 = vset.pattern.permute.xlu0 0
  %59 = vperm.xlu0 %58, %v41
  %v60 = vpop.permute.xlu0 %59
  %61 = vset.pattern.permute.xlu0 0
  %62 = vperm.xlu0 %61, %v42
  %v63 = vpop.permute.xlu0 %62
  %vm64 = vcmp.eq.s32.totalorder %v36, %v57
  %vm65 = vcmp.eq.s32.totalorder %v37, %v57
  %vm66 = vcmp.eq.s32.totalorder %v36, %v60
  %vm67 = vcmp.eq.s32.totalorder %v37, %v60
  %vm68 = vcmp.eq.s32.totalorder %v36, %v63
  %vm69 = vcmp.eq.s32.totalorder %v37, %v63
  %v70 = vsel %vm64, %v29, -1e+30
  %v71 = vsel %vm65, %v30, -1e+30
  %v72 = vsel %vm66, %v31, -1e+30
  %v73 = vsel %vm67, %v32, -1e+30
  %v74 = vsel %vm68, %v33, -1e+30
  %v75 = vsel %vm69, %v34, -1e+30
  %v76 = vmax.f32 %v70, %v71
  %77 = vmax.xlane.f32.xlu0 %v76
  %v78 = vpop.xlane.xlu0 %77
  %v79 = vmax.f32 %v72, %v73
  %80 = vmax.xlane.f32.xlu0 %v79
  %v81 = vpop.xlane.xlu0 %80
  %v82 = vsel %vm49, %v74, -inf
  %v83 = vsel %vm49, %v75, -inf
  %v84 = vmax.f32 %v82, %v83
  %85 = vmax.xlane.f32.xlu0 %v84
  %v86 = vpop.xlane.xlu0 %85
  %v87 = vld [vmem:[#allocation2] sm:$0xff]
  %v88 = vld [vmem:[#allocation2 + $0x8] sm:$0xff]
  %v89 = vld [vmem:[#allocation2 + $0x10] sm:$0x3]
  %v90 = vmax.f32 %v87, %v45
  %v91 = vmax.f32 %v88, %v48
  %v92 = vmax.f32 %v89, %v54
  %v93 = vsub.f32 %v87, %v90
  %v94 = vsub.f32 %v88, %v91
  %v95 = vsub.f32 %v89, %v92
  %v96 = vmul.f32 %v93, 1.442695
  %v97 = vpow.pop %v96
  %v98 = vmul.f32 %v94, 1.442695
  %v99 = vpow.pop %v98
  %v100 = vmul.f32 %v95, 1.442695
  %v101 = vpow.pop %v100
  %v102 = vld [vmem:[#allocation3] sm:$0xff]
  %v103 = vld [vmem:[#allocation3 + $0x8] sm:$0xff]
  %v104 = vld [vmem:[#allocation3 + $0x10] sm:$0x3]
  %v105 = vmul.f32 %v102, %v97
  %v106 = vmul.f32 %v103, %v99
  %v107 = vmul.f32 %v104, %v101
  %109 = vset.pattern.permute.xlu0 0
  %110 = vperm.xlu0 %109, %v90
  %v111 = vpop.permute.xlu0 %110
  %114 = vset.pattern.permute.xlu0 0
  %115 = vperm.xlu0 %114, %v91
  %v116 = vpop.permute.xlu0 %115
  %119 = vset.pattern.permute.xlu0 0
  %120 = vperm.xlu0 %119, %v92
  %v121 = vpop.permute.xlu0 %120
  %v123 = vsub.f32 %v29, %v111
  %v124 = vsub.f32 %v30, %v111
  %v125 = vsub.f32 %v31, %v116
  %v126 = vsub.f32 %v32, %v116
  %v127 = vsub.f32 %v33, %v121
  %v128 = vsub.f32 %v34, %v121
  %v129 = vmul.f32 %v123, 1.442695
  %v130 = vpow.pop %v129
  %v131 = vmul.f32 %v124, 1.442695
  %v132 = vpow.pop %v131
  %v133 = vmul.f32 %v125, 1.442695
  %v134 = vpow.pop %v133
  %v135 = vmul.f32 %v126, 1.442695
  %v136 = vpow.pop %v135
  %v137 = vmul.f32 %v127, 1.442695
  %v138 = vpow.pop %v137
  %v139 = vmul.f32 %v128, 1.442695
  %v140 = vpow.pop %v139
  %v141 = vadd.f32 %v130, %v132
  %142 = vadd.xlane.f32.xlu0 %v141
  %v143 = vpop.xlane.xlu0 %142
  %v144 = vadd.f32 %v134, %v136
  %145 = vadd.xlane.f32.xlu0 %v144
  %v146 = vpop.xlane.xlu0 %145
  %v147 = vsel %vm49, %v138, 0.0
  %v148 = vsel %vm49, %v140, 0.0
  %v149 = vadd.f32 %v147, %v148
  %150 = vadd.xlane.f32.xlu0 %v149
  %v151 = vpop.xlane.xlu0 %150
  %v152 = vadd.f32 %v105, %v143
  %v153 = vadd.f32 %v106, %v146
  %v154 = vadd.f32 %v107, %v151
  %vm155 = vcmask 7168
  %156 = vst.msk [vmem:[#allocation3] sm:$0xff] %vm155, %v152
  %157 = vst.msk [vmem:[#allocation3 + $0x8] sm:$0xff] %vm155, %v153
  %vm158 = vcmask 1024
  %159 = vst.msk [vmem:[#allocation3 + $0x10] sm:$0x3] %vm158, %v154
  %v160 = vld [vmem:[#allocation4] sm:$0xff]
  %v161 = vld [vmem:[#allocation4 + $0x8] sm:$0xff]
  %v162 = vld [vmem:[#allocation4 + $0x10] sm:$0x3]
  %v163 = vmax.f32 %v160, %v78
  %v164 = vmax.f32 %v161, %v81
  %v165 = vmax.f32 %v162, %v86
  %166 = vst.msk [vmem:[#allocation4] sm:$0xff] %vm155, %v163
  %167 = vst.msk [vmem:[#allocation4 + $0x8] sm:$0xff] %vm155, %v164
  %168 = vst.msk [vmem:[#allocation4 + $0x10] sm:$0x3] %vm158, %v165
  %169 = vst.msk [vmem:[#allocation2] sm:$0xff] %vm155, %v90
  %170 = vst.msk [vmem:[#allocation2 + $0x8] sm:$0xff] %vm155, %v91
  %171 = vst.msk [vmem:[#allocation2 + $0x10] sm:$0x3] %vm158, %v92
  // Predicated region
  $region14: #{_forward.1} parent=0 // pred_check
    %p172 = pneg %p11
  $region15: #{_forward.1} parent=0 // pred_check_branch
    %174 = sbr.rel (%p172) target = $region17
  $region16: #{_forward.1} parent=0 // pred_region
    %v175 = vld [vmem:[#allocation2] sm:$0xff]
    %v176 = vld [vmem:[#allocation2 + $0x8] sm:$0xff]
    %v177 = vld [vmem:[#allocation2 + $0x10] sm:$0x3]
    %v178 = vld [vmem:[#allocation3] sm:$0xff]
    %v179 = vld [vmem:[#allocation3 + $0x8] sm:$0xff]
    %v180 = vld [vmem:[#allocation3 + $0x10] sm:$0x3]
    %v181 = vlog2.pop %v178
    %v182 = vmul.f32 %v181, 0.6931472
    %v183 = vlog2.pop %v179
    %v184 = vmul.f32 %v183, 0.6931472
    %v185 = vlog2.pop %v180
    %v186 = vmul.f32 %v185, 0.6931472
    %v187 = vadd.f32 %v175, %v182
    %v188 = vadd.f32 %v176, %v184
    %v189 = vadd.f32 %v177, %v186
    %vm190 = vcmp.ne.s32.totalorder %v26, 4294967196
    %vm191 = vcmp.ne.s32.totalorder %v27, 4294967196
    %vm192 = vcmp.ne.s32.totalorder %v28, 4294967196
    %v193 = vld [vmem:[#allocation4] sm:$0xff]
    %v194 = vld [vmem:[#allocation4 + $0x8] sm:$0xff]
    %v195 = vld [vmem:[#allocation4 + $0x10] sm:$0x3]
    %v196 = vsub.f32 %v187, %v193
    %v197 = vsub.f32 %v188, %v194
    %v198 = vsub.f32 %v189, %v195
    %v199 = vsel %vm190, %v196, 0.0
    %v200 = vsel %vm191, %v197, 0.0
    %v201 = vsel %vm192, %v198, 0.0
    %202 = vst.msk [vmem:[%s2] sm:$0xff] %vm155, %v199
    %203 = vst.msk [vmem:[%s2 + $0x8] sm:$0xff] %vm155, %v200
    %204 = vst.msk [vmem:[%s2 + $0x10] sm:$0x3] %vm158, %v201
  $region17: #{_forward.1} parent=0 // pred_fallthru
    _
  // Predicated region
  $region18: #{_forward.1} parent=0 // pred_check
    _
  $region19: #{_forward.1} parent=0 // pred_check_branch
    %206 = sbr.rel (0) target = $region21
  $region20: #{_forward.1} parent=0 // pred_region
    _
  $region21: #{_forward.1} parent=0 // pred_fallthru
    _
  // Predicated region
  $region22: #{_forward.1} parent=0 // pred_check
    _
  $region23: #{_forward.1} parent=0 // pred_check_branch
    %208 = sbr.rel (0) target = $region25
  $region24: #{_forward.1} parent=0 // pred_region
    _
  $region25: #{_forward.1} parent=0 // pred_fallthru
    _

</llo_original>
